<compile_context>
chip_gen: v7x
topology: tpu7x:2x2x1
jax: 0.10.0
libtpu: 0.0.40
codegen_flags: <defaults>
</compile_context>

<pallas_src>
import jax
import jax.numpy as jnp
from jax.experimental import pallas as pl
from jax.experimental.pallas import tpu as pltpu


def _round_up(n: int, m: int) -> int:
    return ((n + m - 1) // m) * m


def _kernel_layer_kernel(x_ref, w_ref, o_ref):
    # x_ref: (TB, M*K)    -- x[b, i, k] flattened over (i, k)
    # w_ref: (M*K, M*O)   -- block-diagonal weights, resident in VMEM
    # o_ref: (TB, M*O)    -- lane-dense output (M*O = 512 = 4 x 128 lanes here)
    #
    # Single MXU matmul, f32 accumulate, one cast at the store.
    o_ref[...] = jnp.dot(
        x_ref[...], w_ref[...], preferred_element_type=jnp.float32
    ).astype(o_ref.dtype)


def kernel_layer_forward(x, weights, *, block_b: int = 512):
    """Pallas forward for Kernel_Layer.

    x:       (B, m, d_in)
    weights: (m, d_in, d_out)
    returns: (B, m, d_out)  with y[b,i,o] = sum_k x[b,i,k] * weights[i,k,o]
    """
    B, M, K = x.shape
    Mw, Kw, O = weights.shape
    assert (M, K) == (Mw, Kw), "x / weights shape mismatch"

    # --- wrapper-side layout plumbing (tiny, one-time XLA ops) -------------
    # Block-diagonal weight matrix: W_bd[i*K+k, j*O+o] = (i==j) * weights[i,k,o]
    # Size: (M*K) x (M*O) = 64 x 512 = 128 KiB at f32 -> kept resident in VMEM.
    eye = jnp.eye(M, dtype=weights.dtype)
    w_bd = jnp.einsum("ij,iko->ikjo", eye, weights).reshape(M * K, M * O)

    # x at its natural size, flattened to (B, M*K).  No replication.
    x_flat = x.reshape(B, M * K)

    # --- B tiling -----------------------------------------------------------
    # Tile second-to-last dim must be a multiple of 8; pad B up if needed.
    TB = min(block_b, _round_up(B, 8))
    B_pad = _round_up(B, TB)
    if B_pad != B:
        x_flat = jnp.pad(x_flat, ((0, B_pad - B), (0, 0)))
    grid = (B_pad // TB,)

    # NOTE: M*O = 512 here is a multiple of 128 -> fully unmasked lane-dense
    # stores; other module configs remain correct (full-dim block), just with
    # masked stores on the last partial lane group.

    # --- cost estimate (true data sizes, actual dtype width) ----------------
    itemsize = jnp.dtype(x.dtype).itemsize
    mxu_flops = 2 * B_pad * (M * K) * (M * O)  # what the MXU actually does
    bytes_accessed = itemsize * (B_pad * M * K + (M * K) * (M * O) + B_pad * M * O)

    out_flat = pl.pallas_call(
        _kernel_layer_kernel,
        out_shape=jax.ShapeDtypeStruct((B_pad, M * O), x.dtype),
        grid_spec=pltpu.PrefetchScalarGridSpec(
            num_scalar_prefetch=0,
            grid=grid,
            in_specs=[
                # x: one TB-row tile per grid step
                pl.BlockSpec((TB, M * K), lambda b: (b, 0)),
                # weights: constant index -> DMA'd once, stays resident
                pl.BlockSpec((M * K, M * O), lambda b: (0, 0)),
            ],
            out_specs=pl.BlockSpec((TB, M * O), lambda b: (b, 0)),
        ),
        compiler_params=pltpu.CompilerParams(
            # B tiles are independent -> megacore sharding on v7x,
            # harmless no-op on single-TC v5e/v6e.
            dimension_semantics=("parallel",),
            # ~2.5 MiB/step double-buffered; 32 MiB leaves ample headroom and
            # stays within every generation's scoped/physical VMEM.
            vmem_limit_bytes=32 * 1024 * 1024,
        ),
        cost_estimate=pl.CostEstimate(
            flops=mxu_flops, transcendentals=0, bytes_accessed=bytes_accessed
        ),
    )(x_flat, w_bd)

    return out_flat[:B].reshape(B, M, O)


if __name__ == "__main__":
    # Small shapes consistent with the module: m = 16 (from the file),
    # batch B = 2, d_in = 4, d_out = 32  (m * d_out = 512 = 4 x 128 lanes).
    B, m, d_in, d_out = 2, 16, 4, 32

    key = jax.random.PRNGKey(0)
    k_x, k_w = jax.random.split(key, 2)

    x = jax.random.normal(k_x, (B, m, d_in), jnp.float32)
    # nn.init.normal_ on weights of shape (m, d_in, d_out)
    weights = jax.random.normal(k_w, (m, d_in, d_out), jnp.float32)

    out = kernel_layer_forward(x, weights)
    out = jax.block_until_ready(out)

    # Reference: literal transcription of the PyTorch forward
    #   y = sum over d_in of (x.unsqueeze(-1) * weights.unsqueeze(0))
    ref = jnp.sum(x[:, :, :, None] * weights[None, :, :, :], axis=-2)

    assert out.shape == (B, m, d_out)
    assert jnp.allclose(out, ref, atol=1e-4, rtol=1e-5)

    print("KERNEL_OK")
</pallas_src>

<mosaic_0001>
module attributes {stable_mosaic.version = 11 : i64} {
  func.func @_kernel_layer_kernel(%arg0: i32, %arg1: memref<8x64xf32, #tpu.memory_space<vmem>>, %arg2: memref<64x512xf32, #tpu.memory_space<vmem>>, %arg3: memref<8x512xf32, #tpu.memory_space<vmem>>) attributes {dimension_semantics = [#tpu.dimension_semantics<parallel>], iteration_bounds = array<i64: 1>, scalar_prefetch = 0 : i64, scratch_operands = 0 : i64, tpu.core_type = #tpu.core_type<tc>, window_params = [{transform_indices = @transform_0, window_bounds = array<i64: 8, 64>}, {pipeline_mode = #tpu.pipeline_mode<synchronous>, transform_indices = @transform_1, window_bounds = array<i64: 64, 512>}, {transform_indices = @transform_2, window_bounds = array<i64: 8, 512>}]} {
    %c0 = arith.constant 0 : index
    %c0_0 = arith.constant 0 : index
    %0 = vector.load %arg1[%c0, %c0_0] : memref<8x64xf32, #tpu.memory_space<vmem>>, vector<8x64xf32>
    %c0_1 = arith.constant 0 : index
    %c0_2 = arith.constant 0 : index
    %1 = vector.load %arg2[%c0_1, %c0_2] : memref<64x512xf32, #tpu.memory_space<vmem>>, vector<64x512xf32>
    %cst = arith.constant dense<0.000000e+00> : vector<8x512xf32>
    %2 = tpu.matmul %0, %1, %cst {dimension_numbers = #tpu.dot_dimension_numbers<[1], [0], [0], [1], [0, 0, 1, 1], [], []>} : vector<8x64xf32>, vector<64x512xf32>, vector<8x512xf32> -> vector<8x512xf32>
    %c0_3 = arith.constant 0 : index
    %c0_4 = arith.constant 0 : index
    %3 = vector.load %arg3[%c0_3, %c0_4] : memref<8x512xf32, #tpu.memory_space<vmem>>, vector<8x512xf32>
    tpu.vector_store %arg3[%c0_3, %c0_4], %2 {strides = array<i32>} : memref<8x512xf32, #tpu.memory_space<vmem>>, vector<8x512xf32>,
    return
  }
  func.func @transform_0(%arg0: i32) -> (i32, i32) {
    %c0_i32 = arith.constant 0 : i32
    %c0_i32_0 = arith.constant 0 : i32
    return %arg0, %c0_i32 : i32, i32
  }
  func.func @transform_1(%arg0: i32) -> (i32, i32) {
    %c0_i32 = arith.constant 0 : i32
    %c0_i32_0 = arith.constant 0 : i32
    %c0_i32_1 = arith.constant 0 : i32
    return %c0_i32, %c0_i32_0 : i32, i32
  }
  func.func @transform_2(%arg0: i32) -> (i32, i32) {
    %c0_i32 = arith.constant 0 : i32
    %c0_i32_0 = arith.constant 0 : i32
    return %arg0, %c0_i32 : i32, i32
  }
}

</mosaic_0001>

<llo_original>
// kernel: tpu_custom_call.1
$region0: #{tpu_custom_call.1}
  #allocation0 [shape = 'u32[]', space=smem, size = 0x4, offset = 0x4, fixed_abs, tag = 'smem constant byte address 0x4 - core index']
  #allocation1 [shape = 'u32[144,128]{1,0:T(1,128)}', space=vmem, size = 0x12000, scoped, tag = 'internal scratch']
  %s0 = inlined_call_operand.hbm [shape: f32[8,64], index: 0, kind: input, shape index: {}]
  %s1 = inlined_call_operand.hbm [shape: f32[64,512], index: 1, kind: input, shape index: {}]
  %s2 = inlined_call_operand.hbm [shape: f32[8,512], index: 2, kind: output, shape index: {}]
  %s3 = sld [smem:[#allocation0]]
  $region26: #{tpu_custom_call.1} parent=0
    _
  %s5 = ssub.s32 1, %s3
  %s6 = scalar_select 0, %s5, %s3
  $region1: #{tpu_custom_call.1} parent=0
    #allocation2 [shape = 'u8[4096]{0}', space=vmem, size = 0x1000, scoped, tag = 'input window, operand 0, single buffered']
    #allocation3 [shape = 's32[1]{0}', space=sflag, size = 0x4, scoped, tag = 'scoped memory for tpu_custom_call.1']
    #allocation4 [shape = 's32[1]{0}', space=sflag, size = 0x4, scoped, tag = 'scoped memory for tpu_custom_call.1']
    #allocation5 [shape = 'u8[131072]{0}', space=vmem, size = 0x20000, scoped, tag = 'input window, operand 1, single buffered']
    #allocation6 [shape = 's32[1]{0}', space=sflag, size = 0x4, scoped, tag = 'scoped memory for tpu_custom_call.1']
    #allocation7 [shape = 'u8[16384]{0}', space=vmem, size = 0x4000, scoped, tag = 'output window, operand 0, single buffered']
    %7 = vsyncpa [#allocation3], 0
    %8 = vsyncpa [#allocation6], 0
    %9 = vsyncpa [#allocation4], 0
    // Predicated region
    $region2: #{tpu_custom_call.1} parent=1 // pred_check
      _
    $region3: #{tpu_custom_call.1} parent=1 // pred_check_branch
      %11 = sbr.rel (0) target = $region5
    $region4: #{tpu_custom_call.1} parent=1 // pred_region
      %s13 = ssub.s32 128, 128
      %14 = vsyncadd [#allocation3], %s13
      %s16 = sshll.u32 [#allocation2], 4
      %s17 = int_to_ptr.vmem [resolvable:$true] %s16
      %19 = dma.hbm_to_vmem [thread:$0]  %s0, 128, %s17, [#allocation3]
    $region5: #{tpu_custom_call.1} parent=1 // pred_fallthru
      _
    // Predicated region
    $region6: #{tpu_custom_call.1} parent=1 // pred_check
      _
    $region7: #{tpu_custom_call.1} parent=1 // pred_check_branch
      %21 = sbr.rel (0) target = $region9
    $region8: #{tpu_custom_call.1} parent=1 // pred_region
      %s23 = ssub.s32 4096, 4096
      %24 = vsyncadd [#allocation6], %s23
      %s25 = sshll.u32 [#allocation5], 4
      %s26 = int_to_ptr.vmem [resolvable:$true] %s25
      %31 = dma.hbm_to_vmem [thread:$0]  %s1, 4096, %s26, [#allocation6], 512, 512, 32
    $region9: #{tpu_custom_call.1} parent=1 // pred_fallthru
      _
    // Predicated region
    $region10: #{tpu_custom_call.1} parent=1 // pred_check
      _
    $region11: #{tpu_custom_call.1} parent=1 // pred_check_branch
      %33 = sbr.rel (0) target = $region13
    $region12: #{tpu_custom_call.1} parent=1 // pred_region
      %34 = dma.done [#allocation3], 128
    $region13: #{tpu_custom_call.1} parent=1 // pred_fallthru
      _
    // Predicated region
    $region14: #{tpu_custom_call.1} parent=1 // pred_check
      _
    $region15: #{tpu_custom_call.1} parent=1 // pred_check_branch
      %36 = sbr.rel (0) target = $region17
    $region16: #{tpu_custom_call.1} parent=1 // pred_region
      %37 = dma.done [#allocation6], 4096
    $region17: #{tpu_custom_call.1} parent=1 // pred_fallthru
      _
    %v38 = vld [vmem:[#allocation2] sm:$0xff]
    %v39 = vld [vmem:[#allocation5] sm:$0xff]
    %v40 = vld [vmem:[#allocation5 + $0x8] sm:$0xff]
    %v41 = vld [vmem:[#allocation5 + $0x10] sm:$0xff]
    %v42 = vld [vmem:[#allocation5 + $0x18] sm:$0xff]
    %v43 = vld [vmem:[#allocation5 + $0x20] sm:$0xff]
    %v44 = vld [vmem:[#allocation5 + $0x28] sm:$0xff]
    %v45 = vld [vmem:[#allocation5 + $0x30] sm:$0xff]
    %v46 = vld [vmem:[#allocation5 + $0x38] sm:$0xff]
    %v47 = vld [vmem:[#allocation5 + $0x40] sm:$0xff]
    %v48 = vld [vmem:[#allocation5 + $0x48] sm:$0xff]
    %v49 = vld [vmem:[#allocation5 + $0x50] sm:$0xff]
    %v50 = vld [vmem:[#allocation5 + $0x58] sm:$0xff]
    %v51 = vld [vmem:[#allocation5 + $0x60] sm:$0xff]
    %v52 = vld [vmem:[#allocation5 + $0x68] sm:$0xff]
    %v53 = vld [vmem:[#allocation5 + $0x70] sm:$0xff]
    %v54 = vld [vmem:[#allocation5 + $0x78] sm:$0xff]
    %v55 = vld [vmem:[#allocation5 + $0x80] sm:$0xff]
    %v56 = vld [vmem:[#allocation5 + $0x88] sm:$0xff]
    %v57 = vld [vmem:[#allocation5 + $0x90] sm:$0xff]
    %v58 = vld [vmem:[#allocation5 + $0x98] sm:$0xff]
    %v59 = vld [vmem:[#allocation5 + $0xa0] sm:$0xff]
    %v60 = vld [vmem:[#allocation5 + $0xa8] sm:$0xff]
    %v61 = vld [vmem:[#allocation5 + $0xb0] sm:$0xff]
    %v62 = vld [vmem:[#allocation5 + $0xb8] sm:$0xff]
    %v63 = vld [vmem:[#allocation5 + $0xc0] sm:$0xff]
    %v64 = vld [vmem:[#allocation5 + $0xc8] sm:$0xff]
    %v65 = vld [vmem:[#allocation5 + $0xd0] sm:$0xff]
    %v66 = vld [vmem:[#allocation5 + $0xd8] sm:$0xff]
    %v67 = vld [vmem:[#allocation5 + $0xe0] sm:$0xff]
    %v68 = vld [vmem:[#allocation5 + $0xe8] sm:$0xff]
    %v69 = vld [vmem:[#allocation5 + $0xf0] sm:$0xff]
    %v70 = vld [vmem:[#allocation5 + $0xf8] sm:$0xff]
    %vm71 = vcmask 523264
    %v73 = vsel %vm71, %v38, 0
    %75 = vmatprep.subr.mxu0 %v40
    %76 = vmatpush1.msra.mxu0 %v39
    %77 = vmatprep.subr.mxu0 %v44
    %78 = vmatpush1.msra.mxu0 %v43
    %79 = vmatprep.subr.mxu0 %v48
    %80 = vmatpush1.msra.mxu0 %v47
    %81 = vmatprep.subr.mxu0 %v52
    %82 = vmatpush1.msra.mxu0 %v51
    %83 = vmatprep.subr.mxu0 %v56
    %84 = vmatpush1.msra.mxu0 %v55
    %85 = vmatprep.subr.mxu0 %v60
    %86 = vmatpush1.msra.mxu0 %v59
    %87 = vmatprep.subr.mxu0 %v64
    %88 = vmatpush1.msra.mxu0 %v63
    %89 = vmatprep.subr.mxu0 %v68
    %90 = vmatpush1.msra.mxu0 %v67
    %91 = vmatprep.subr.mxu0 0.0
    %92 = vmatpush1.msra.mxu0 0.0
    %93 = vmatprep.subr.mxu0 0.0
    %94 = vmatpush1.msra.mxu0 0.0
    %95 = vmatprep.subr.mxu0 0.0
    %96 = vmatpush1.msra.mxu0 0.0
    %97 = vmatprep.subr.mxu0 0.0
    %98 = vmatpush1.msra.mxu0 0.0
    %99 = vmatprep.subr.mxu0 0.0
    %100 = vmatpush1.msra.mxu0 0.0
    %101 = vmatprep.subr.mxu0 0.0
    %102 = vmatpush1.msra.mxu0 0.0
    %103 = vmatprep.subr.mxu0 0.0
    %104 = vmatpush1.msra.mxu0 0.0
    %105 = vmatprep.subr.mxu0 0.0
    %106 = vmatpush1.msra.mxu0 0.0
    %107 = vmatprep.subr.mxu0 0.0
    %108 = vmatpush1.msra.mxu0 0.0
    %109 = vmatprep.subr.mxu0 0.0
    %110 = vmatpush1.msra.mxu0 0.0
    %111 = vmatprep.subr.mxu0 0.0
    %112 = vmatpush1.msra.mxu0 0.0
    %113 = vmatprep.subr.mxu0 0.0
    %114 = vmatpush1.msra.mxu0 0.0
    %115 = vmatprep.subr.mxu0 0.0
    %116 = vmatpush1.msra.mxu0 0.0
    %117 = vmatprep.subr.mxu0 0.0
    %118 = vmatpush1.msra.mxu0 0.0
    %119 = vmatprep.subr.mxu0 0.0
    %120 = vmatpush1.msra.mxu0 0.0
    %121 = vmatprep.subr.mxu0 0.0
    %122 = vmatpush1.msra.mxu0 0.0
    %123 = vmatprep.subr.mxu0 0.0
    %124 = vmatpush1.msra.mxu0 0.0
    %125 = vmatprep.subr.mxu0 0.0
    %126 = vmatpush1.msra.mxu0 0.0
    %127 = vmatprep.subr.mxu0 0.0
    %128 = vmatpush1.msra.mxu0 0.0
    %129 = vmatprep.subr.mxu0 0.0
    %130 = vmatpush1.msra.mxu0 0.0
    %131 = vmatprep.subr.mxu0 0.0
    %132 = vmatpush1.msra.mxu0 0.0
    %133 = vmatprep.subr.mxu0 0.0
    %134 = vmatpush1.msra.mxu0 0.0
    %135 = vmatprep.subr.mxu0 0.0
    %136 = vmatpush1.msra.mxu0 0.0
    %137 = vmatprep.subr.mxu0 0.0
    %138 = vmatpush1.msra.mxu0 0.0
    %139 = vmatprep.mubr.f32.mxu0 0.0
    %140 = vmatmul.mubr.f32.gmra.mrb[0].mxu0 %v73
    %v141 = vpop.f32.mrb[0].mxu0
    %v142 = vadd.f32 0.0, %v141
    %v143 = vpop.f32.mrb[0].mxu0
    %v144 = vadd.f32 0.0, %v143
    %145 = vdwg.mxu0
    %146 = vmatprep.subr.mxu0 %v42
    %147 = vmatpush1.msra.mxu0 %v41
    %148 = vmatprep.subr.mxu0 %v46
    %149 = vmatpush1.msra.mxu0 %v45
    %150 = vmatprep.subr.mxu0 %v50
    %151 = vmatpush1.msra.mxu0 %v49
    %152 = vmatprep.subr.mxu0 %v54
    %153 = vmatpush1.msra.mxu0 %v53
    %154 = vmatprep.subr.mxu0 %v58
    %155 = vmatpush1.msra.mxu0 %v57
    %156 = vmatprep.subr.mxu0 %v62
    %157 = vmatpush1.msra.mxu0 %v61
    %158 = vmatprep.subr.mxu0 %v66
    %159 = vmatpush1.msra.mxu0 %v65
    %160 = vmatprep.subr.mxu0 %v70
    %161 = vmatpush1.msra.mxu0 %v69
    %162 = vmatprep.subr.mxu0 0.0
    %163 = vmatpush1.msra.mxu0 0.0
    %164 = vmatprep.subr.mxu0 0.0
    %165 = vmatpush1.msra.mxu0 0.0
    %166 = vmatprep.subr.mxu0 0.0
    %167 = vmatpush1.msra.mxu0 0.0
    %168 = vmatprep.subr.mxu0 0.0
    %169 = vmatpush1.msra.mxu0 0.0
    %170 = vmatprep.subr.mxu0 0.0
    %171 = vmatpush1.msra.mxu0 0.0
    %172 = vmatprep.subr.mxu0 0.0
    %173 = vmatpush1.msra.mxu0 0.0
    %174 = vmatprep.subr.mxu0 0.0
    %175 = vmatpush1.msra.mxu0 0.0
    %176 = vmatprep.subr.mxu0 0.0
    %177 = vmatpush1.msra.mxu0 0.0
    %178 = vmatprep.subr.mxu0 0.0
    %179 = vmatpush1.msra.mxu0 0.0
    %180 = vmatprep.subr.mxu0 0.0
    %181 = vmatpush1.msra.mxu0 0.0
    %182 = vmatprep.subr.mxu0 0.0
    %183 = vmatpush1.msra.mxu0 0.0
    %184 = vmatprep.subr.mxu0 0.0
    %185 = vmatpush1.msra.mxu0 0.0
    %186 = vmatprep.subr.mxu0 0.0
    %187 = vmatpush1.msra.mxu0 0.0
    %188 = vmatprep.subr.mxu0 0.0
    %189 = vmatpush1.msra.mxu0 0.0
    %190 = vmatprep.subr.mxu0 0.0
    %191 = vmatpush1.msra.mxu0 0.0
    %192 = vmatprep.subr.mxu0 0.0
    %193 = vmatpush1.msra.mxu0 0.0
    %194 = vmatprep.subr.mxu0 0.0
    %195 = vmatpush1.msra.mxu0 0.0
    %196 = vmatprep.subr.mxu0 0.0
    %197 = vmatpush1.msra.mxu0 0.0
    %198 = vmatprep.subr.mxu0 0.0
    %199 = vmatpush1.msra.mxu0 0.0
    %200 = vmatprep.subr.mxu0 0.0
    %201 = vmatpush1.msra.mxu0 0.0
    %202 = vmatprep.subr.mxu0 0.0
    %203 = vmatpush1.msra.mxu0 0.0
    %204 = vmatprep.subr.mxu0 0.0
    %205 = vmatpush1.msra.mxu0 0.0
    %206 = vmatprep.subr.mxu0 0.0
    %207 = vmatpush1.msra.mxu0 0.0
    %208 = vmatprep.subr.mxu0 0.0
    %209 = vmatpush1.msra.mxu0 0.0
    %210 = vmatprep.mubr.f32.mxu0 0.0
    %211 = vmatmul.mubr.f32.gmra.mrb[0].mxu0 %v73
    %v212 = vpop.f32.mrb[0].mxu0
    %v213 = vadd.f32 0.0, %v212
    %v214 = vpop.f32.mrb[0].mxu0
    %v215 = vadd.f32 0.0, %v214
    %216 = vdwg.mxu0
    %217 = vst [vmem:[#allocation7] sm:$0xff] %v142
    %218 = vst [vmem:[#allocation7 + $0x8] sm:$0xff] %v144
    %219 = vst [vmem:[#allocation7 + $0x10] sm:$0xff] %v213
    %220 = vst [vmem:[#allocation7 + $0x18] sm:$0xff] %v215
    // Predicated region
    $region18: #{tpu_custom_call.1} parent=1 // pred_check
      _
    $region19: #{tpu_custom_call.1} parent=1 // pred_check_branch
      %222 = sbr.rel (0) target = $region21
    $region20: #{tpu_custom_call.1} parent=1 // pred_region
      %s224 = ssub.s32 512, 512
      %225 = vsyncadd [#allocation4], %s224
      %s227 = sshll.u32 [#allocation7], 4
      %s228 = int_to_ptr.vmem [resolvable:$true] %s227
      %230 = dma.vmem_to_hbm [thread:$0]  %s228, 512, %s2, [#allocation4]
    $region21: #{tpu_custom_call.1} parent=1 // pred_fallthru
      _
    // Predicated region
    $region22: #{tpu_custom_call.1} parent=1 // pred_check
      _
    $region23: #{tpu_custom_call.1} parent=1 // pred_check_branch
      %232 = sbr.rel (0) target = $region25
    $region24: #{tpu_custom_call.1} parent=1 // pred_region
      %233 = dma.done [#allocation4], 512
    $region25: #{tpu_custom_call.1} parent=1 // pred_fallthru
      _
    %234 = vsyncpa [#allocation3], 1
    %235 = vsyncpa [#allocation6], 1
    %236 = vsyncpa [#allocation4], 1

</llo_original>
